<compile_context>
chip_gen: v6e
topology: v6e:2x2x1
jax: 0.10.0
libtpu: 0.0.40
codegen_flags: <defaults>
</compile_context>

<pallas_src>
import jax
import jax.numpy as jnp
from jax.experimental import pallas as pl
from jax.experimental.pallas import tpu as pltpu


def _make_dispact_kernel(compute_dtype):
    def _kernel(x_ref, o_ref):
        x = x_ref[...].astype(compute_dtype)
        # Match torch.nn.functional.softplus(beta=1, threshold=20):
        #   softplus(x) = x               if x > 20
        #               = log1p(exp(x))   otherwise
        # Note: exp(x) is evaluated for all lanes; for x >> 20 it saturates to
        # inf and log1p(inf) = inf, which the where() then discards. That is
        # intentional and correct -- do not "fix" it.
        sp = jnp.where(x > 20.0, x, jnp.log1p(jnp.exp(x)))
        # torch.clamp(min=1e-4, max=1e4)
        o_ref[...] = jnp.clip(sp, 0.0001, 10000.0).astype(o_ref.dtype)

    return _kernel


def _round_up(a: int, b: int) -> int:
    return ((a + b - 1) // b) * b


def _compute_dtype_for(dtype) -> jnp.dtype:
    dtype = jnp.dtype(dtype)
    if dtype == jnp.float32:
        return jnp.float32
    if dtype == jnp.bfloat16:
        # v6e/v7x have native bf16 VPU/EUP paths; v5e and older do not, so
        # upcast there. Computing in bf16 keeps the kernel under the memory
        # wall at v7x bandwidth (f32 math roughly doubles VALU/EUP pressure).
        kind = jax.devices()[0].device_kind.lower()
        if any(tag in kind for tag in ("v2", "v3", "v4", "v5")):
            return jnp.float32
        return jnp.bfloat16
    # float16 and anything else: upcast for accuracy/safety.
    return jnp.float32


def dispact(x: jax.Array, *, donate_input: bool = False) -> jax.Array:
    """Applies clamp(softplus(x), 1e-4, 1e4) elementwise. Any shape, float dtype.

    donate_input=True adds input_output_aliases={0: 0} so XLA can reuse the
    input HBM buffer for the output; only enable it when the caller actually
    donates x (otherwise XLA inserts a defensive copy, which costs bandwidth).
    """
    orig_shape = x.shape
    n = x.size
    if n == 0:
        return x

    if jnp.dtype(x.dtype) == jnp.float64:
        # TPUs have no native f64 path; compute in f32 and cast back.
        return dispact(x.astype(jnp.float32), donate_input=donate_input).astype(x.dtype)

    LANES = 128
    itemsize = jnp.dtype(x.dtype).itemsize
    # Minimum sublane multiple for a partial (non-full-extent) row block:
    # f32 -> 8, bf16/f16 -> 16, 8-bit -> 32.
    sublane = {4: 8, 2: 16, 1: 32}.get(itemsize, 8)

    # Pick a 2-D view (R, C) without any padding:
    #   * n % 128 == 0  -> lane-dense (n//128, 128) slab (best layout).
    #   * otherwise     -> keep the original last dim as the (full-extent)
    #                      lane dim; Pallas allows a full-extent ragged dim,
    #                      so no pad + slice (no extra HBM round-trips).
    if n % LANES == 0:
        C = LANES
    elif x.ndim >= 2:
        C = orig_shape[-1]
    else:
        C = n
    R = n // C
    slab = x.reshape(R, C)  # layout-preserving -> free

    # Block selection: ~4 MiB blocks; split only when there is enough work,
    # and use an even step count so v7x's two TensorCores get balanced shards.
    # TODO(synk): pathological ragged last dims (C*itemsize >> 4 MiB and not a
    # multiple of 128) would need a lane-dim split; not handled here.
    BLOCK_BYTES = 4 * 1024 * 1024
    MIN_SPLIT_BYTES = 512 * 1024
    row_bytes = C * itemsize
    total_bytes = R * row_bytes

    if total_bytes <= 2 * MIN_SPLIT_BYTES or R < 2 * sublane:
        # Small tensor: single full-extent block, grid of 1 (no per-step
        # overhead, no pointless split on single-TC v5e/v6e).
        block_rows = R
    else:
        target_rows = max(sublane, BLOCK_BYTES // row_bytes)
        num_blocks = pl.cdiv(R, min(target_rows, R))
        if num_blocks % 2:
            num_blocks += 1  # even split across v7x's 2 TCs; harmless elsewhere
        block_rows = min(R, _round_up(pl.cdiv(R, num_blocks), sublane))

    grid = (pl.cdiv(R, block_rows),)  # ragged last block is masked, not dropped

    kernel = _make_dispact_kernel(_compute_dtype_for(x.dtype))

    out = pl.pallas_call(
        kernel,
        out_shape=jax.ShapeDtypeStruct((R, C), slab.dtype),
        grid_spec=pl.GridSpec(
            grid=grid,
            in_specs=[pl.BlockSpec((block_rows, C), lambda i: (i, 0))],
            out_specs=pl.BlockSpec((block_rows, C), lambda i: (i, 0)),
        ),
        compiler_params=pltpu.CompilerParams(
            dimension_semantics=("parallel",),
            # 4 MiB blocks x 2 arrays x 2 buffers = ~16 MiB; 32 MiB fits the
            # scoped/physical VMEM of v5e (128), v6e (128) and v7x (64).
            vmem_limit_bytes=32 * 1024 * 1024,
        ),
        input_output_aliases=({0: 0} if donate_input else {}),
    )(slab)

    return out.reshape(orig_shape)


if __name__ == "__main__":
    key = jax.random.PRNGKey(0)

    def _ref(x):
        return jnp.clip(
            jnp.where(x > 20.0, x, jnp.log1p(jnp.exp(x))), 0.0001, 10000.0
        )

    # NCHW input, small shapes: batch=2, channels=4, spatial=16x16 (2048 elems,
    # multiple of 128 -> lane-dense slab path).
    x = jax.random.normal(key, (2, 4, 16, 16), dtype=jnp.float32) * 5.0
    y = jax.block_until_ready(dispact(x))
    assert y.shape == x.shape and y.dtype == x.dtype
    assert jnp.allclose(y, _ref(x), rtol=1e-6, atol=1e-6), "mismatch vs reference"

    # Ragged size (105 elements, not a multiple of 128) exercises the
    # no-pad full-extent-lane path.
    x2 = jax.random.normal(jax.random.PRNGKey(1), (3, 5, 7), dtype=jnp.float32) * 5.0
    y2 = jax.block_until_ready(dispact(x2))
    assert y2.shape == x2.shape and y2.dtype == x2.dtype
    assert jnp.allclose(y2, _ref(x2), rtol=1e-6, atol=1e-6), "ragged mismatch"

    print("KERNEL_OK")
</pallas_src>

<mosaic_0001>
module attributes {stable_mosaic.version = 11 : i64} {
  func.func @_kernel(%arg0: i32, %arg1: memref<16x128xf32, #tpu.memory_space<vmem>>, %arg2: memref<16x128xf32, #tpu.memory_space<vmem>>) attributes {dimension_semantics = [#tpu.dimension_semantics<parallel>], iteration_bounds = array<i64: 1>, scalar_prefetch = 0 : i64, scratch_operands = 0 : i64, tpu.core_type = #tpu.core_type<tc>, window_params = [{transform_indices = @transform_0, window_bounds = array<i64: 16, 128>}, {transform_indices = @transform_1, window_bounds = array<i64: 16, 128>}]} {
    %c0 = arith.constant 0 : index
    %c0_0 = arith.constant 0 : index
    %0 = vector.load %arg1[%c0, %c0_0] : memref<16x128xf32, #tpu.memory_space<vmem>>, vector<16x128xf32>
    %cst = arith.constant 2.000000e+01 : f32
    %1 = vector.broadcast %cst : f32 to vector<16x128xf32>
    %2 = arith.cmpf ogt, %0, %1 : vector<16x128xf32>
    %3 = math.exp %0 : vector<16x128xf32>
    %4 = math.log1p %3 : vector<16x128xf32>
    %5 = arith.select %2, %0, %4 : vector<16x128xi1>, vector<16x128xf32>
    %cst_1 = arith.constant 9.99999974E-5 : f32
    %cst_2 = arith.constant 1.000000e+04 : f32
    %6 = vector.broadcast %cst_1 : f32 to vector<16x128xf32>
    %7 = arith.maximumf %6, %5 : vector<16x128xf32>
    %8 = vector.broadcast %cst_2 : f32 to vector<16x128xf32>
    %9 = arith.minimumf %8, %7 : vector<16x128xf32>
    %c0_3 = arith.constant 0 : index
    %c0_4 = arith.constant 0 : index
    %10 = vector.load %arg2[%c0_3, %c0_4] : memref<16x128xf32, #tpu.memory_space<vmem>>, vector<16x128xf32>
    tpu.vector_store %arg2[%c0_3, %c0_4], %9 {strides = array<i32>} : memref<16x128xf32, #tpu.memory_space<vmem>>, vector<16x128xf32>,
    return
  }
  func.func @transform_0(%arg0: i32) -> (i32, i32) {
    %c0_i32 = arith.constant 0 : i32
    %c0_i32_0 = arith.constant 0 : i32
    return %arg0, %c0_i32 : i32, i32
  }
  func.func @transform_1(%arg0: i32) -> (i32, i32) {
    %c0_i32 = arith.constant 0 : i32
    %c0_i32_0 = arith.constant 0 : i32
    return %arg0, %c0_i32 : i32, i32
  }
}

</mosaic_0001>

<llo_original>
// kernel: tpu_custom_call.1
$region0: #{tpu_custom_call.1}
  #allocation0 [shape = 'u32[]', space=smem, size = 0x4, offset = 0x4, fixed_abs, tag = 'smem constant byte address 0x4 - core index']
  #allocation1 [shape = 'u32[144,128]{1,0:T(1,128)}', space=vmem, size = 0x12000, scoped, tag = 'internal scratch']
  %s0 = inlined_call_operand.hbm [shape: f32[16,128], index: 0, kind: input, shape index: {}]
  %s1 = inlined_call_operand.hbm [shape: f32[16,128], index: 1, kind: output, shape index: {}]
  %s2 = sld [smem:[#allocation0]]
  $region18: #{tpu_custom_call.1} parent=0
    _
  %s4 = ssub.s32 1, %s2
  %s5 = scalar_select 0, %s4, %s2
  $region1: #{tpu_custom_call.1} parent=0
    #allocation2 [shape = 'u8[8192]{0}', space=vmem, size = 0x2000, scoped, tag = 'input window, operand 0, single buffered']
    #allocation3 [shape = 's32[1]{0}', space=sflag, size = 0x4, scoped, tag = 'scoped memory for tpu_custom_call.1']
    #allocation4 [shape = 's32[1]{0}', space=sflag, size = 0x4, scoped, tag = 'scoped memory for tpu_custom_call.1']
    #allocation5 [shape = 'u8[8192]{0}', space=vmem, size = 0x2000, scoped, tag = 'output window, operand 0, single buffered']
    %6 = vsyncpa [#allocation3], 0
    %7 = vsyncpa [#allocation4], 0
    // Predicated region
    $region2: #{tpu_custom_call.1} parent=1 // pred_check
      _
    $region3: #{tpu_custom_call.1} parent=1 // pred_check_branch
      %9 = sbr.rel (0) target = $region5
    $region4: #{tpu_custom_call.1} parent=1 // pred_region
      %s11 = ssub.s32 256, 256
      %12 = vsyncadd [#allocation3], %s11
      %s13 = sshll.u32 [#allocation2], 4
      %s14 = int_to_ptr.vmem [resolvable:$true] %s13
      %19 = dma.hbm_to_vmem [thread:$0]  %s0, 256, %s14, [#allocation3], 128, 128, 8
    $region5: #{tpu_custom_call.1} parent=1 // pred_fallthru
      _
    // Predicated region
    $region6: #{tpu_custom_call.1} parent=1 // pred_check
      _
    $region7: #{tpu_custom_call.1} parent=1 // pred_check_branch
      %21 = sbr.rel (0) target = $region9
    $region8: #{tpu_custom_call.1} parent=1 // pred_region
      %22 = dma.done [#allocation3], 256
    $region9: #{tpu_custom_call.1} parent=1 // pred_fallthru
      _
    %v23 = vld [vmem:[#allocation2] sm:$0xff]
    %v24 = vld [vmem:[#allocation2 + $0x8] sm:$0xff]
    %vm25 = vcmp.gt.f32.partialorder %v23, 20.0
    %vm26 = vcmp.gt.f32.partialorder %v24, 20.0
    %v27 = vmul.f32 %v23, 1.442695
    %v28 = vpow.pop %v27
    %v29 = vmul.f32 %v24, 1.442695
    %v30 = vpow.pop %v29
    %v31 = vadd.f32 %v28, 1.0
    %v32 = vlog2.pop %v31
    %v33 = vmul.f32 %v32, 0.6931472
    %v34 = vmul.f32 -0.5, %v28
    %v35 = vadd.f32 %v34, 1.0
    %v36 = vmul.f32 %v35, %v28
    %v37 = vand.u32 2147483647, %v28
    %vm38 = vcmp.lt.f32.partialorder %v37, 0.0004427343
    %v39 = vsel %vm38, %v36, %v33
    %v40 = vadd.f32 %v30, 1.0
    %v41 = vlog2.pop %v40
    %v42 = vmul.f32 %v41, 0.6931472
    %v43 = vmul.f32 -0.5, %v30
    %v44 = vadd.f32 %v43, 1.0
    %v45 = vmul.f32 %v44, %v30
    %v46 = vand.u32 2147483647, %v30
    %vm47 = vcmp.lt.f32.partialorder %v46, 0.0004427343
    %v48 = vsel %vm47, %v45, %v42
    %v49 = vsel %vm25, %v23, %v39
    %v50 = vsel %vm26, %v24, %v48
    %v51 = vmax.f32 %v49, 0.0001
    %v52 = vmax.f32 %v50, 0.0001
    %v53 = vmin.f32 %v51, 10000.0
    %v54 = vmin.f32 %v52, 10000.0
    %55 = vst [vmem:[#allocation5] sm:$0xff] %v53
    %56 = vst [vmem:[#allocation5 + $0x8] sm:$0xff] %v54
    // Predicated region
    $region10: #{tpu_custom_call.1} parent=1 // pred_check
      _
    $region11: #{tpu_custom_call.1} parent=1 // pred_check_branch
      %58 = sbr.rel (0) target = $region13
    $region12: #{tpu_custom_call.1} parent=1 // pred_region
      %s60 = ssub.s32 256, 256
      %61 = vsyncadd [#allocation4], %s60
      %s62 = sshll.u32 [#allocation5], 4
      %s63 = int_to_ptr.vmem [resolvable:$true] %s62
      %68 = dma.vmem_to_hbm [thread:$0]  %s63, 256, %s1, [#allocation4], 128, 128, 8
    $region13: #{tpu_custom_call.1} parent=1 // pred_fallthru
      _
    // Predicated region
    $region14: #{tpu_custom_call.1} parent=1 // pred_check
      _
    $region15: #{tpu_custom_call.1} parent=1 // pred_check_branch
      %70 = sbr.rel (0) target = $region17
    $region16: #{tpu_custom_call.1} parent=1 // pred_region
      %71 = dma.done [#allocation4], 256
    $region17: #{tpu_custom_call.1} parent=1 // pred_fallthru
      _
    %72 = vsyncpa [#allocation3], 1
    %73 = vsyncpa [#allocation4], 1

</llo_original>
